<compile_context>
chip_gen: v5e
topology: v5e:2x2
jax: 0.10.0
libtpu: 0.0.40
codegen_flags: <defaults>
</compile_context>

<pallas_src>
import jax
import jax.numpy as jnp
from jax.experimental import pallas as pl
from jax.experimental.pallas import tpu as pltpu


def _round_up(v, m):
    return ((v + m - 1) // m) * m


def _mlp_forward_kernel(x_ref, w1_ref, b1_ref, w2_ref, b2_ref, o_ref):
    # x:  (B, D_in)  bf16     w1: (D_in, H)  bf16    b1: (1, H)     f32
    # w2: (H, D_out) bf16     b2: (1, D_out) f32     o:  (B, D_out) f32
    x = x_ref[...]
    h = jnp.dot(x, w1_ref[...], preferred_element_type=jnp.float32)
    h = jnp.maximum(h + b1_ref[...], 0.0)          # f32 bias + ReLU (VPU)
    y = jnp.dot(h.astype(jnp.bfloat16), w2_ref[...],
                preferred_element_type=jnp.float32)
    o_ref[...] = (y + b2_ref[...]).astype(o_ref.dtype)


def learning_machine_forward(x, w1, b1, w2, b2, *, batch_tile=256):
    """Pallas-backed equivalent of LearningMachine.forward(x)."""
    B, D_in = x.shape
    H = w1.shape[1]
    D_out = w2.shape[1]

    # Lane-dense padding: feature dims -> multiples of 128, batch -> mult of 16.
    Dp = _round_up(D_in, 128)
    Hp = _round_up(H, 128)
    Np = _round_up(D_out, 128)
    Bp = _round_up(B, 16)

    x_p = jnp.pad(x, ((0, Bp - B), (0, Dp - D_in))).astype(jnp.bfloat16)
    w1_p = jnp.pad(w1, ((0, Dp - D_in), (0, Hp - H))).astype(jnp.bfloat16)
    b1_p = jnp.pad(b1, ((0, 0), (0, Hp - H))).astype(jnp.float32)
    w2_p = jnp.pad(w2, ((0, Hp - H), (0, Np - D_out))).astype(jnp.bfloat16)
    b2_p = jnp.pad(b2, ((0, 0), (0, Np - D_out))).astype(jnp.float32)

    if Bp <= batch_tile:
        # Small batch: single block, no grid, no pipeline bookkeeping.
        out_p = pl.pallas_call(
            _mlp_forward_kernel,
            out_shape=jax.ShapeDtypeStruct((Bp, Np), jnp.float32),
            in_specs=[pl.BlockSpec(memory_space=pltpu.MemorySpace.VMEM)] * 5,
            out_specs=pl.BlockSpec(memory_space=pltpu.MemorySpace.VMEM),
        )(x_p, w1_p, b1_p, w2_p, b2_p)
    else:
        # Large batch: tile over B, weights stay VMEM-resident (constant
        # index_map), batch axis is parallel (megacore-friendly on v7x).
        tile = batch_tile
        Bp2 = _round_up(Bp, tile)
        if Bp2 != Bp:
            x_p = jnp.pad(x_p, ((0, Bp2 - Bp), (0, 0)))
        out_p = pl.pallas_call(
            _mlp_forward_kernel,
            out_shape=jax.ShapeDtypeStruct((Bp2, Np), jnp.float32),
            grid=(Bp2 // tile,),
            in_specs=[
                pl.BlockSpec((tile, Dp), lambda i: (i, 0)),
                pl.BlockSpec((Dp, Hp), lambda i: (0, 0)),
                pl.BlockSpec((1, Hp), lambda i: (0, 0)),
                pl.BlockSpec((Hp, Np), lambda i: (0, 0)),
                pl.BlockSpec((1, Np), lambda i: (0, 0)),
            ],
            out_specs=pl.BlockSpec((tile, Np), lambda i: (i, 0)),
            compiler_params=pltpu.CompilerParams(
                dimension_semantics=("parallel",),
            ),
        )(x_p, w1_p, b1_p, w2_p, b2_p)

    return out_p[:B, :D_out]


# TODO(synk): LearningMachine.learn()/test() (optimizer step, autodiff loss
# graph) have no clean single-kernel Pallas equivalent; only forward is done.


if __name__ == "__main__":
    key = jax.random.PRNGKey(0)
    k_x, k_w1, k_b1, k_w2, k_b2 = jax.random.split(key, 5)

    B, D_in, H, D_out = 8, 32, 64, 16

    x = jax.random.normal(k_x, (B, D_in), dtype=jnp.float32)
    w1 = jax.random.normal(k_w1, (D_in, H), dtype=jnp.float32) * 0.1
    b1 = jax.random.normal(k_b1, (1, H), dtype=jnp.float32) * 0.1
    w2 = jax.random.normal(k_w2, (H, D_out), dtype=jnp.float32) * 0.1
    b2 = jax.random.normal(k_b2, (1, D_out), dtype=jnp.float32) * 0.1

    y = learning_machine_forward(x, w1, b1, w2, b2)
    jax.block_until_ready(y)

    # Reference check in plain JAX (tolerance relaxed for bf16 matmul inputs).
    y_ref = jnp.maximum(x @ w1 + b1, 0.0) @ w2 + b2
    assert y.shape == y_ref.shape, "shape mismatch vs reference"
    assert jnp.allclose(y, y_ref, atol=2e-2, rtol=2e-2), "mismatch vs reference"

    print("KERNEL_OK")
</pallas_src>

<mosaic_0001>
module attributes {stable_mosaic.version = 11 : i64} {
  func.func @_mlp_forward_kernel(%arg0: memref<16x128xbf16, #tpu.memory_space<vmem>>, %arg1: memref<128x128xbf16, #tpu.memory_space<vmem>>, %arg2: memref<1x128xf32, #tpu.memory_space<vmem>>, %arg3: memref<128x128xbf16, #tpu.memory_space<vmem>>, %arg4: memref<1x128xf32, #tpu.memory_space<vmem>>, %arg5: memref<16x128xf32, #tpu.memory_space<vmem>>) attributes {dimension_semantics = [], scalar_prefetch = 0 : i64, scratch_operands = 0 : i64, tpu.core_type = #tpu.core_type<tc>} {
    %c0 = arith.constant 0 : index
    %c0_0 = arith.constant 0 : index
    %0 = vector.load %arg0[%c0, %c0_0] : memref<16x128xbf16, #tpu.memory_space<vmem>>, vector<16x128xbf16>
    %c0_1 = arith.constant 0 : index
    %c0_2 = arith.constant 0 : index
    %1 = vector.load %arg1[%c0_1, %c0_2] : memref<128x128xbf16, #tpu.memory_space<vmem>>, vector<128x128xbf16>
    %cst = arith.constant dense<0.000000e+00> : vector<16x128xf32>
    %2 = tpu.matmul %0, %1, %cst {dimension_numbers = #tpu.dot_dimension_numbers<[1], [0], [0], [1], [0, 0, 1, 1], [], []>} : vector<16x128xbf16>, vector<128x128xbf16>, vector<16x128xf32> -> vector<16x128xf32>
    %c0_3 = arith.constant 0 : index
    %c0_4 = arith.constant 0 : index
    %3 = vector.load %arg2[%c0_3, %c0_4] : memref<1x128xf32, #tpu.memory_space<vmem>>, vector<1x128xf32>
    %4 = vector.broadcast %3 : vector<1x128xf32> to vector<16x128xf32>
    %5 = arith.addf %2, %4 : vector<16x128xf32>
    %cst_5 = arith.constant 0.000000e+00 : f32
    %6 = vector.broadcast %cst_5 : f32 to vector<16x128xf32>
    %7 = arith.maximumf %5, %6 : vector<16x128xf32>
    %8 = arith.truncf %7 : vector<16x128xf32> to vector<16x128xbf16>
    %c0_6 = arith.constant 0 : index
    %c0_7 = arith.constant 0 : index
    %9 = vector.load %arg3[%c0_6, %c0_7] : memref<128x128xbf16, #tpu.memory_space<vmem>>, vector<128x128xbf16>
    %cst_8 = arith.constant dense<0.000000e+00> : vector<16x128xf32>
    %10 = tpu.matmul %8, %9, %cst_8 {dimension_numbers = #tpu.dot_dimension_numbers<[1], [0], [0], [1], [0, 0, 1, 1], [], []>} : vector<16x128xbf16>, vector<128x128xbf16>, vector<16x128xf32> -> vector<16x128xf32>
    %c0_9 = arith.constant 0 : index
    %c0_10 = arith.constant 0 : index
    %11 = vector.load %arg4[%c0_9, %c0_10] : memref<1x128xf32, #tpu.memory_space<vmem>>, vector<1x128xf32>
    %12 = vector.broadcast %11 : vector<1x128xf32> to vector<16x128xf32>
    %13 = arith.addf %10, %12 : vector<16x128xf32>
    %c0_11 = arith.constant 0 : index
    %c0_12 = arith.constant 0 : index
    %14 = vector.load %arg5[%c0_11, %c0_12] : memref<16x128xf32, #tpu.memory_space<vmem>>, vector<16x128xf32>
    tpu.vector_store %arg5[%c0_11, %c0_12], %13 {strides = array<i32>} : memref<16x128xf32, #tpu.memory_space<vmem>>, vector<16x128xf32>,
    return
  }
}

</mosaic_0001>

<llo_original>
// kernel: tpu_custom_call.1
$region0: #{tpu_custom_call.1}
  #allocation0 [shape = 'u32[]', space=smem, size = 0x4, offset = 0x4, fixed_abs, tag = 'smem constant byte address 0x4 - core index']
  #allocation1 [shape = 'u32[72,128]{1,0:T(1,128)}', space=vmem, size = 0x9000, scoped, tag = 'internal scratch']
  %s0 = inlined_call_operand.hbm [shape: bf16[16,128], index: 0, kind: input, shape index: {}]
  %s1 = inlined_call_operand.hbm [shape: bf16[128,128], index: 1, kind: input, shape index: {}]
  %s2 = inlined_call_operand.vmem [shape: f32[1,128], index: 2, kind: input, shape index: {}]
  %s3 = inlined_call_operand.hbm [shape: bf16[128,128], index: 3, kind: input, shape index: {}]
  %s4 = inlined_call_operand.vmem [shape: f32[1,128], index: 4, kind: input, shape index: {}]
  %s5 = inlined_call_operand.hbm [shape: f32[16,128], index: 5, kind: output, shape index: {}]
  %s6 = sld [smem:[#allocation0]]
  $region42: #{tpu_custom_call.1} parent=0
    _
  %s8 = ssub.s32 1, %s6
  %s9 = scalar_select 0, %s8, %s6
  $region1: #{tpu_custom_call.1} parent=0
    #allocation2 [shape = 'u8[4096]{0}', space=vmem, size = 0x1000, scoped, tag = 'input window, operand 0, single buffered']
    #allocation3 [shape = 's32[1]{0}', space=sflag, size = 0x4, scoped, tag = 'scoped memory for tpu_custom_call.1']
    #allocation4 [shape = 's32[1]{0}', space=sflag, size = 0x4, scoped, tag = 'scoped memory for tpu_custom_call.1']
    #allocation5 [shape = 'u8[32768]{0}', space=vmem, size = 0x8000, scoped, tag = 'input window, operand 1, single buffered']
    #allocation6 [shape = 's32[1]{0}', space=sflag, size = 0x4, scoped, tag = 'scoped memory for tpu_custom_call.1']
    #allocation7 [shape = 'u8[32768]{0}', space=vmem, size = 0x8000, scoped, tag = 'input window, operand 3, single buffered']
    #allocation8 [shape = 'u8[8192]{0}', space=vmem, size = 0x2000, scoped, tag = 'output window, operand 0, single buffered']
    %10 = vsyncpa [#allocation3], 0
    %11 = vsyncpa [#allocation6], 0
    %12 = vsyncpa [#allocation4], 0
    // Predicated region
    $region2: #{tpu_custom_call.1} parent=1 // pred_check
      _
    $region3: #{tpu_custom_call.1} parent=1 // pred_check_branch
      %14 = sbr.rel (0) target = $region5
    $region4: #{tpu_custom_call.1} parent=1 // pred_region
      %16 = vsyncadd [#allocation3], 0
      %s17 = sshll.u32 %s0, 4
      %s18 = int_to_ptr.hbm [resolvable:$true] %s17
      %s19 = sshll.u32 [#allocation2], 4
      %s20 = int_to_ptr.vmem [resolvable:$true] %s19
      %25 = dma.hbm_to_vmem [thread:$0]  %s18, 128, %s20, [#allocation3], 64, 64, 4
    $region5: #{tpu_custom_call.1} parent=1 // pred_fallthru
      _
    // Predicated region
    $region6: #{tpu_custom_call.1} parent=1 // pred_check
      _
    $region7: #{tpu_custom_call.1} parent=1 // pred_check_branch
      %27 = sbr.rel (0) target = $region9
    $region8: #{tpu_custom_call.1} parent=1 // pred_region
      %29 = vsyncadd [#allocation6], 0
      %s30 = sshll.u32 %s1, 4
      %s31 = int_to_ptr.hbm [resolvable:$true] %s30
      %s32 = sshll.u32 [#allocation5], 4
      %s33 = int_to_ptr.vmem [resolvable:$true] %s32
      %38 = dma.hbm_to_vmem [thread:$0]  %s31, 1024, %s33, [#allocation6], 64, 64, 4
    $region9: #{tpu_custom_call.1} parent=1 // pred_fallthru
      _
    // Predicated region
    $region10: #{tpu_custom_call.1} parent=1 // pred_check
      _
    $region11: #{tpu_custom_call.1} parent=1 // pred_check_branch
      %40 = sbr.rel (0) target = $region13
    $region12: #{tpu_custom_call.1} parent=1 // pred_region
      _
    $region13: #{tpu_custom_call.1} parent=1 // pred_fallthru
      _
    // Predicated region
    $region14: #{tpu_custom_call.1} parent=1 // pred_check
      _
    $region15: #{tpu_custom_call.1} parent=1 // pred_check_branch
      %42 = sbr.rel (0) target = $region17
    $region16: #{tpu_custom_call.1} parent=1 // pred_region
      %44 = vsyncadd [#allocation6], 0
      %s45 = sshll.u32 %s3, 4
      %s46 = int_to_ptr.hbm [resolvable:$true] %s45
      %s47 = sshll.u32 [#allocation7], 4
      %s48 = int_to_ptr.vmem [resolvable:$true] %s47
      %53 = dma.hbm_to_vmem [thread:$0]  %s46, 1024, %s48, [#allocation6], 64, 64, 4
    $region17: #{tpu_custom_call.1} parent=1 // pred_fallthru
      _
    // Predicated region
    $region18: #{tpu_custom_call.1} parent=1 // pred_check
      _
    $region19: #{tpu_custom_call.1} parent=1 // pred_check_branch
      %55 = sbr.rel (0) target = $region21
    $region20: #{tpu_custom_call.1} parent=1 // pred_region
      _
    $region21: #{tpu_custom_call.1} parent=1 // pred_fallthru
      _
    // Predicated region
    $region22: #{tpu_custom_call.1} parent=1 // pred_check
      _
    $region23: #{tpu_custom_call.1} parent=1 // pred_check_branch
      %57 = sbr.rel (0) target = $region25
    $region24: #{tpu_custom_call.1} parent=1 // pred_region
      %59 = dma.done [#allocation3], 128
    $region25: #{tpu_custom_call.1} parent=1 // pred_fallthru
      _
    // Predicated region
    $region26: #{tpu_custom_call.1} parent=1 // pred_check
      _
    $region27: #{tpu_custom_call.1} parent=1 // pred_check_branch
      %61 = sbr.rel (0) target = $region29
    $region28: #{tpu_custom_call.1} parent=1 // pred_region
      %63 = dma.done [#allocation6], 1024
    $region29: #{tpu_custom_call.1} parent=1 // pred_fallthru
      _
    // Predicated region
    $region30: #{tpu_custom_call.1} parent=1 // pred_check
      _
    $region31: #{tpu_custom_call.1} parent=1 // pred_check_branch
      %65 = sbr.rel (0) target = $region33
    $region32: #{tpu_custom_call.1} parent=1 // pred_region
      %67 = dma.done [#allocation6], 1024
    $region33: #{tpu_custom_call.1} parent=1 // pred_fallthru
      _
    %v68 = vld [vmem:[#allocation2] sm:$0xf]
    %v69 = vld [vmem:[#allocation2 + $0x4] sm:$0xf]
    %v70 = vld [vmem:[#allocation5] sm:$0xf]
    %v71 = vld [vmem:[#allocation5 + $0x4] sm:$0xf]
    %v72 = vld [vmem:[#allocation5 + $0x8] sm:$0xf]
    %v73 = vld [vmem:[#allocation5 + $0xc] sm:$0xf]
    %v74 = vld [vmem:[#allocation5 + $0x10] sm:$0xf]
    %v75 = vld [vmem:[#allocation5 + $0x14] sm:$0xf]
    %v76 = vld [vmem:[#allocation5 + $0x18] sm:$0xf]
    %v77 = vld [vmem:[#allocation5 + $0x1c] sm:$0xf]
    %v78 = vld [vmem:[#allocation5 + $0x20] sm:$0xf]
    %v79 = vld [vmem:[#allocation5 + $0x24] sm:$0xf]
    %v80 = vld [vmem:[#allocation5 + $0x28] sm:$0xf]
    %v81 = vld [vmem:[#allocation5 + $0x2c] sm:$0xf]
    %v82 = vld [vmem:[#allocation5 + $0x30] sm:$0xf]
    %v83 = vld [vmem:[#allocation5 + $0x34] sm:$0xf]
    %v84 = vld [vmem:[#allocation5 + $0x38] sm:$0xf]
    %v85 = vld [vmem:[#allocation5 + $0x3c] sm:$0xf]
    %v86 = vld [vmem:[%s2] sm:$0x1]
    %v88 = vperm.slane %v86, 0
    %v92 = vunpack.c.l.b16 %v68
    %v93 = vunpack.c.l.b16 %v69
    %v94 = vpack.c.b16 %v93, %v92
    %v112 = vunpack.c.l.b16 %v70
    %v113 = vunpack.c.l.b16 %v71
    %v114 = vunpack.c.l.b16 %v72
    %v115 = vunpack.c.l.b16 %v73
    %v116 = vunpack.c.l.b16 %v74
    %v117 = vunpack.c.l.b16 %v75
    %v118 = vunpack.c.l.b16 %v76
    %v119 = vunpack.c.l.b16 %v77
    %v120 = vunpack.c.l.b16 %v78
    %v121 = vunpack.c.l.b16 %v79
    %v122 = vunpack.c.l.b16 %v80
    %v123 = vunpack.c.l.b16 %v81
    %v124 = vunpack.c.l.b16 %v82
    %v125 = vunpack.c.l.b16 %v83
    %v126 = vunpack.c.l.b16 %v84
    %v127 = vunpack.c.l.b16 %v85
    %v128 = vpack.c.b16 %v113, %v112
    %v129 = vpack.c.b16 %v115, %v114
    %v130 = vpack.c.b16 %v117, %v116
    %v131 = vpack.c.b16 %v119, %v118
    %v132 = vpack.c.b16 %v121, %v120
    %v133 = vpack.c.b16 %v123, %v122
    %v134 = vpack.c.b16 %v125, %v124
    %v135 = vpack.c.b16 %v127, %v126
    %144 = vmatpush.bf16.msra.mxu0 %v135
    %145 = vmatpush.bf16.msra.mxu0 %v134
    %146 = vmatpush.bf16.msra.mxu0 %v133
    %147 = vmatpush.bf16.msra.mxu0 %v132
    %148 = vmatpush.bf16.msra.mxu0 %v131
    %149 = vmatpush.bf16.msra.mxu0 %v130
    %150 = vmatpush.bf16.msra.mxu0 %v129
    %151 = vmatpush.bf16.msra.mxu0 %v128
    %152 = vmatmul.bf16.gmra.mxu0 %v94
    %v153 = vpop.f32.mrf.mxu0
    %v154 = vadd.f32 %v88, %v153
    %v155 = vpop.f32.mrf.mxu0
    %v156 = vadd.f32 %v88, %v155
    %157 = vdwg.mxu0
    %v158 = vmax.f32 %v154, 0.0
    %v159 = vmax.f32 %v156, 0.0
    %v160 = vpack.c.bf16 %v159, %v158
    %v161 = vld [vmem:[#allocation7] sm:$0xf]
    %v162 = vld [vmem:[#allocation7 + $0x4] sm:$0xf]
    %v163 = vld [vmem:[#allocation7 + $0x8] sm:$0xf]
    %v164 = vld [vmem:[#allocation7 + $0xc] sm:$0xf]
    %v165 = vld [vmem:[#allocation7 + $0x10] sm:$0xf]
    %v166 = vld [vmem:[#allocation7 + $0x14] sm:$0xf]
    %v167 = vld [vmem:[#allocation7 + $0x18] sm:$0xf]
    %v168 = vld [vmem:[#allocation7 + $0x1c] sm:$0xf]
    %v169 = vld [vmem:[#allocation7 + $0x20] sm:$0xf]
    %v170 = vld [vmem:[#allocation7 + $0x24] sm:$0xf]
    %v171 = vld [vmem:[#allocation7 + $0x28] sm:$0xf]
    %v172 = vld [vmem:[#allocation7 + $0x2c] sm:$0xf]
    %v173 = vld [vmem:[#allocation7 + $0x30] sm:$0xf]
    %v174 = vld [vmem:[#allocation7 + $0x34] sm:$0xf]
    %v175 = vld [vmem:[#allocation7 + $0x38] sm:$0xf]
    %v176 = vld [vmem:[#allocation7 + $0x3c] sm:$0xf]
    %v177 = vld [vmem:[%s4] sm:$0x1]
    %v179 = vperm.slane %v177, 0
    %v197 = vunpack.c.l.b16 %v161
    %v198 = vunpack.c.l.b16 %v162
    %v199 = vunpack.c.l.b16 %v163
    %v200 = vunpack.c.l.b16 %v164
    %v201 = vunpack.c.l.b16 %v165
    %v202 = vunpack.c.l.b16 %v166
    %v203 = vunpack.c.l.b16 %v167
    %v204 = vunpack.c.l.b16 %v168
    %v205 = vunpack.c.l.b16 %v169
    %v206 = vunpack.c.l.b16 %v170
    %v207 = vunpack.c.l.b16 %v171
    %v208 = vunpack.c.l.b16 %v172
    %v209 = vunpack.c.l.b16 %v173
    %v210 = vunpack.c.l.b16 %v174
    %v211 = vunpack.c.l.b16 %v175
    %v212 = vunpack.c.l.b16 %v176
    %v213 = vpack.c.b16 %v198, %v197
    %v214 = vpack.c.b16 %v200, %v199
    %v215 = vpack.c.b16 %v202, %v201
    %v216 = vpack.c.b16 %v204, %v203
    %v217 = vpack.c.b16 %v206, %v205
    %v218 = vpack.c.b16 %v208, %v207
    %v219 = vpack.c.b16 %v210, %v209
    %v220 = vpack.c.b16 %v212, %v211
    %229 = vmatpush.bf16.msra.mxu0 %v220
    %230 = vmatpush.bf16.msra.mxu0 %v219
    %231 = vmatpush.bf16.msra.mxu0 %v218
    %232 = vmatpush.bf16.msra.mxu0 %v217
    %233 = vmatpush.bf16.msra.mxu0 %v216
    %234 = vmatpush.bf16.msra.mxu0 %v215
    %235 = vmatpush.bf16.msra.mxu0 %v214
    %236 = vmatpush.bf16.msra.mxu0 %v213
    %237 = vmatmul.bf16.gmra.mxu0 %v160
    %v238 = vpop.f32.mrf.mxu0
    %v239 = vadd.f32 %v179, %v238
    %v240 = vpop.f32.mrf.mxu0
    %v241 = vadd.f32 %v179, %v240
    %242 = vdwg.mxu0
    %243 = vst [vmem:[#allocation8] sm:$0xff] %v239
    %244 = vst [vmem:[#allocation8 + $0x8] sm:$0xff] %v241
    // Predicated region
    $region34: #{tpu_custom_call.1} parent=1 // pred_check
      _
    $region35: #{tpu_custom_call.1} parent=1 // pred_check_branch
      %246 = sbr.rel (0) target = $region37
    $region36: #{tpu_custom_call.1} parent=1 // pred_region
      %248 = vsyncadd [#allocation4], 0
      %s249 = sshll.u32 [#allocation8], 4
      %s250 = int_to_ptr.vmem [resolvable:$true] %s249
      %s251 = sshll.u32 %s5, 4
      %s252 = int_to_ptr.hbm [resolvable:$true] %s251
      %257 = dma.vmem_to_hbm [thread:$0]  %s250, 256, %s252, [#allocation4], 128, 128, 8
    $region37: #{tpu_custom_call.1} parent=1 // pred_fallthru
      _
    // Predicated region
    $region38: #{tpu_custom_call.1} parent=1 // pred_check
      _
    $region39: #{tpu_custom_call.1} parent=1 // pred_check_branch
      %259 = sbr.rel (0) target = $region41
    $region40: #{tpu_custom_call.1} parent=1 // pred_region
      %261 = dma.done [#allocation4], 256
    $region41: #{tpu_custom_call.1} parent=1 // pred_fallthru
      _
    %262 = vsyncpa [#allocation3], 1
    %263 = vsyncpa [#allocation6], 1
    %264 = vsyncpa [#allocation4], 1

</llo_original>
